<compile_context>
chip_gen: v7x
topology: tpu7x:2x2x1
jax: 0.10.0
libtpu: 0.0.40
codegen_flags: <defaults>
</compile_context>

<pallas_src>
import jax
import jax.numpy as jnp
from jax.experimental import pallas as pl
from jax.experimental.pallas import tpu as pltpu


def _round_up(x: int, m: int) -> int:
    return (x + m - 1) // m * m


_TANH_TILE_BYTES = 2 * 1024 * 1024  # budget for the (TQ, TK, Ap) f32 tile


def _additive_attention_kernel(
    bias_ref,    # SMEM (1, 1)      : Wa.bias + ba
    x_q_ref,     # VMEM (1, TQ, Dp) : query rows of x (already (T, D) layout)
    x_k_ref,     # VMEM (1, TK, Dp) : key rows of x
    wg1_ref,     # VMEM (Dp, Ap)    : Wg1^T (zero padded)
    wg2_ref,     # VMEM (Dp, Ap)    : Wg2^T (zero padded)
    bg_ref,      # VMEM (1, Ap)     : bg (zero padded)
    wa_ref,      # VMEM (1, Ap)     : Wa weight row (zero padded)
    o_ref,       # VMEM (1, TQ, Dp) : output block, resident across key tiles
    g1_scratch,  # VMEM (TQ, Ap) f32: cached query projection
):
    ki = pl.program_id(2)

    @pl.when(ki == 0)
    def _init():
        # Query projection reused across all key tiles of this (b, q-tile).
        g1_scratch[...] = jnp.dot(
            x_q_ref[0], wg1_ref[...], preferred_element_type=jnp.float32
        )
        o_ref[...] = jnp.zeros_like(o_ref)

    x_k = x_k_ref[0]                                              # (TK, Dp)
    # Key projection with bg folded in (saves a VPU add over the big tile).
    g2 = (
        jnp.dot(x_k, wg2_ref[...], preferred_element_type=jnp.float32)
        + bg_ref[...]
    )                                                             # (TK, Ap)

    g1 = g1_scratch[...]                                          # (TQ, Ap)
    # Bounded (TQ, TK, Ap) tanh tile -- never the full (T, T, A) tensor.
    gnn = jnp.tanh(g1[:, None, :] + g2[None, :, :])

    # Contract the attention dim with Wa; add the scalar bias from SMEM.
    wa = wa_ref[...]                                              # (1, Ap)
    scores = jnp.sum(gnn * wa[None, :, :], axis=-1) + bias_ref[0, 0]   # (TQ, TK)
    att = jax.nn.sigmoid(scores)

    # Accumulate att @ x_keys into the resident output block.
    o_ref[0] += jnp.dot(att, x_k, preferred_element_type=jnp.float32)


def _pick_tiles(T: int, Ap: int):
    """Choose (TQ, TK, Tp): the tanh tile stays within budget and the padded
    sequence length Tp is a multiple of both tile sizes."""
    Tp8 = _round_up(T, 8)
    if Tp8 < 128 and Tp8 * Tp8 * Ap * 4 <= _TANH_TILE_BYTES:
        return Tp8, Tp8, Tp8
    TK = 128
    TQ = 8
    for cand in (128, 64, 32, 16, 8):     # divisors of 128 -> Tp stays aligned
        if cand * TK * Ap * 4 <= _TANH_TILE_BYTES:
            TQ = cand
            break
    return TQ, TK, _round_up(T, 128)


@jax.jit
def additive_attention(x, wg1_t, wg2_t, bg, wa_row, bias_total):
    """x: (B, D, T) f32 (channels-first, like the PyTorch module's input).
    Returns (B, T, D) f32 == torch.matmul(att, x.transpose(1, 2))."""
    B, D, T = x.shape
    A = wg1_t.shape[1]

    # One fused XLA transpose + pad; the kernel sees lane-dense (T, D) tiles.
    x_td = jnp.transpose(x, (0, 2, 1)).astype(jnp.float32)        # (B, T, D)

    Dp = _round_up(D, 128)
    Ap = _round_up(A, 128)
    TQ, TK, Tp = _pick_tiles(T, Ap)

    # Zero padding is exact:
    #  * padded D columns: zero weight rows -> g1/g2 unchanged; zero x columns
    #    give zero (discarded) output columns,
    #  * padded A columns: zero Wg columns + zero bg + zero Wa -> contribute 0,
    #  * padded key rows: x rows are zero -> att @ 0 contributes 0,
    #  * padded query rows: extra output rows, sliced off below.
    x_p = jnp.zeros((B, Tp, Dp), jnp.float32).at[:, :T, :D].set(x_td)
    wg1_p = jnp.zeros((Dp, Ap), jnp.float32).at[:D, :A].set(wg1_t.astype(jnp.float32))
    wg2_p = jnp.zeros((Dp, Ap), jnp.float32).at[:D, :A].set(wg2_t.astype(jnp.float32))
    bg_p = jnp.zeros((1, Ap), jnp.float32).at[0, :A].set(bg.astype(jnp.float32))
    wa_p = jnp.zeros((1, Ap), jnp.float32).at[0, :A].set(wa_row.astype(jnp.float32))
    bias_p = jnp.reshape(bias_total, (1, 1)).astype(jnp.float32)

    nQ = Tp // TQ
    nK = Tp // TK

    out_p = pl.pallas_call(
        _additive_attention_kernel,
        out_shape=jax.ShapeDtypeStruct((B, Tp, Dp), jnp.float32),
        grid_spec=pltpu.PrefetchScalarGridSpec(
            num_scalar_prefetch=0,
            grid=(B, nQ, nK),
            in_specs=[
                # Scalar bias lives in SMEM for the whole kernel.
                pl.BlockSpec(memory_space=pltpu.MemorySpace.SMEM),
                pl.BlockSpec((1, TQ, Dp), lambda b, qi, ki: (b, qi, 0)),  # x (queries)
                pl.BlockSpec((1, TK, Dp), lambda b, qi, ki: (b, ki, 0)),  # x (keys)
                pl.BlockSpec((Dp, Ap), lambda b, qi, ki: (0, 0)),         # Wg1^T
                pl.BlockSpec((Dp, Ap), lambda b, qi, ki: (0, 0)),         # Wg2^T
                pl.BlockSpec((1, Ap), lambda b, qi, ki: (0, 0)),          # bg
                pl.BlockSpec((1, Ap), lambda b, qi, ki: (0, 0)),          # Wa row
            ],
            out_specs=pl.BlockSpec((1, TQ, Dp), lambda b, qi, ki: (b, qi, 0)),
            scratch_shapes=[pltpu.VMEM((TQ, Ap), jnp.float32)],
        ),
        compiler_params=pltpu.CompilerParams(
            # batch / query-tile axes shard across TensorCores (v7x megacore);
            # the key axis carries the resident-output accumulation.
            dimension_semantics=("parallel", "parallel", "arbitrary"),
        ),
    )(bias_p, x_p, x_p, wg1_p, wg2_p, bg_p, wa_p)

    return out_p[:, :T, :D]


def additive_attention_ref(x, wg1_t, wg2_t, bg, wa_row, bias_total):
    # Pure-JAX mirror of the PyTorch forward.
    x_td = jnp.transpose(x, (0, 2, 1))                               # (B, T, D)
    g1 = x_td @ wg1_t                                                # (B, T, A)
    g2 = x_td @ wg2_t                                                # (B, T, A)
    gnn = jnp.tanh(g1[:, :, None, :] + g2[:, None, :, :] + bg)       # (B, T, T, A)
    att = jax.nn.sigmoid(jnp.einsum("btsa,a->bts", gnn, wa_row) + bias_total[0])
    return jnp.einsum("bts,bsd->btd", att, x_td)                     # (B, T, D)


def _make_inputs(key, B, D, T, A):
    k_x, k_w1, k_w2, k_bg, k_wa, k_wb = jax.random.split(key, 6)
    x = jax.random.normal(k_x, (B, D, T), dtype=jnp.float32)
    # nn.Linear stores (out, in); we keep the (in, out) transpose for y = x @ W^T.
    wg1_t = 0.1 * jax.random.normal(k_w1, (D, A), dtype=jnp.float32)
    wg2_t = 0.1 * jax.random.normal(k_w2, (D, A), dtype=jnp.float32)
    bg = 0.1 * jax.random.normal(k_bg, (A,), dtype=jnp.float32)
    wa_row = 0.1 * jax.random.normal(k_wa, (A,), dtype=jnp.float32)   # Wa.weight row
    wa_bias = 0.1 * jax.random.normal(k_wb, (1,), dtype=jnp.float32)  # Wa.bias
    ba = jnp.zeros((1,), dtype=jnp.float32)                           # ba (init zeros)
    return x, wg1_t, wg2_t, bg, wa_row, wa_bias + ba


if __name__ == "__main__":
    key = jax.random.PRNGKey(0)
    k_small, k_big = jax.random.split(key)

    # Small toy shapes (single key tile).
    B, D, T, A = 2, 32, 8, 64
    args = _make_inputs(k_small, B, D, T, A)
    out = jax.block_until_ready(additive_attention(*args))
    ref = jax.block_until_ready(additive_attention_ref(*args))
    assert out.shape == (B, T, D)
    assert jnp.allclose(out, ref, atol=1e-3, rtol=1e-3), "mismatch (small shapes)"

    # Module-default dims (input_dim=96, attention_dim=256) with T large enough
    # to exercise the multi-key-tile accumulation path.
    B2, D2, T2, A2 = 2, 96, 160, 256
    args2 = _make_inputs(k_big, B2, D2, T2, A2)
    out2 = jax.block_until_ready(additive_attention(*args2))
    ref2 = jax.block_until_ready(additive_attention_ref(*args2))
    assert out2.shape == (B2, T2, D2)
    assert jnp.allclose(out2, ref2, atol=1e-3, rtol=1e-3), "mismatch (default dims)"

    print("KERNEL_OK")
</pallas_src>

<mosaic_0001>
module attributes {stable_mosaic.version = 11 : i64} {
  func.func @_additive_attention_kernel(%arg0: i32, %arg1: i32, %arg2: i32, %arg3: memref<1x1xf32, #tpu.memory_space<smem>>, %arg4: memref<1x8x128xf32, #tpu.memory_space<vmem>>, %arg5: memref<1x8x128xf32, #tpu.memory_space<vmem>>, %arg6: memref<128x128xf32, #tpu.memory_space<vmem>>, %arg7: memref<128x128xf32, #tpu.memory_space<vmem>>, %arg8: memref<1x128xf32, #tpu.memory_space<vmem>>, %arg9: memref<1x128xf32, #tpu.memory_space<vmem>>, %arg10: memref<1x8x128xf32, #tpu.memory_space<vmem>>, %arg11: memref<8x128xf32, #tpu.memory_space<vmem>>) attributes {dimension_semantics = [#tpu.dimension_semantics<parallel>, #tpu.dimension_semantics<parallel>, #tpu.dimension_semantics<arbitrary>], iteration_bounds = array<i64: 2, 1, 1>, scalar_prefetch = 0 : i64, scratch_operands = 1 : i64, tpu.core_type = #tpu.core_type<tc>, window_params = [{transform_indices = @transform_0, window_bounds = array<i64: 1, 1>}, {transform_indices = @transform_1, window_bounds = array<i64: 1, 8, 128>}, {transform_indices = @transform_2, window_bounds = array<i64: 1, 8, 128>}, {pipeline_mode = #tpu.pipeline_mode<synchronous>, transform_indices = @transform_3, window_bounds = array<i64: 128, 128>}, {pipeline_mode = #tpu.pipeline_mode<synchronous>, transform_indices = @transform_4, window_bounds = array<i64: 128, 128>}, {pipeline_mode = #tpu.pipeline_mode<synchronous>, transform_indices = @transform_5, window_bounds = array<i64: 1, 128>}, {pipeline_mode = #tpu.pipeline_mode<synchronous>, transform_indices = @transform_6, window_bounds = array<i64: 1, 128>}, {transform_indices = @transform_7, window_bounds = array<i64: 1, 8, 128>}]} {
    %c0_i32 = arith.constant 0 : i32
    %0 = arith.cmpi eq, %arg2, %c0_i32 : i32
    %1 = arith.extui %0 : i1 to i32
    %c0_i32_0 = arith.constant 0 : i32
    %2 = arith.cmpi ne, %1, %c0_i32_0 : i32
    scf.if %2 {
      %c0_22 = arith.constant 0 : index
      %c0_23 = arith.constant 0 : index
      %c0_24 = arith.constant 0 : index
      %37 = vector.load %arg4[%c0_22, %c0_23, %c0_24] : memref<1x8x128xf32, #tpu.memory_space<vmem>>, vector<1x8x128xf32>
      %38 = vector.shape_cast %37 : vector<1x8x128xf32> to vector<8x128xf32>
      %c0_25 = arith.constant 0 : index
      %c0_26 = arith.constant 0 : index
      %39 = vector.load %arg6[%c0_25, %c0_26] : memref<128x128xf32, #tpu.memory_space<vmem>>, vector<128x128xf32>
      %cst_27 = arith.constant dense<0.000000e+00> : vector<8x128xf32>
      %40 = tpu.matmul %38, %39, %cst_27 {dimension_numbers = #tpu.dot_dimension_numbers<[1], [0], [0], [1], [0, 0, 1, 1], [], []>} : vector<8x128xf32>, vector<128x128xf32>, vector<8x128xf32> -> vector<8x128xf32>
      %c0_28 = arith.constant 0 : index
      %c0_29 = arith.constant 0 : index
      %41 = vector.load %arg11[%c0_28, %c0_29] : memref<8x128xf32, #tpu.memory_space<vmem>>, vector<8x128xf32>
      tpu.vector_store %arg11[%c0_28, %c0_29], %40 {strides = array<i32>} : memref<8x128xf32, #tpu.memory_space<vmem>>, vector<8x128xf32>,
      %cst_30 = arith.constant 0.000000e+00 : f32
      %42 = vector.broadcast %cst_30 : f32 to vector<1x8x128xf32>
      %c0_31 = arith.constant 0 : index
      %c0_32 = arith.constant 0 : index
      %c0_33 = arith.constant 0 : index
      %43 = vector.load %arg10[%c0_31, %c0_32, %c0_33] : memref<1x8x128xf32, #tpu.memory_space<vmem>>, vector<1x8x128xf32>
      tpu.vector_store %arg10[%c0_31, %c0_32, %c0_33], %42 {strides = array<i32>} : memref<1x8x128xf32, #tpu.memory_space<vmem>>, vector<1x8x128xf32>,
    } else {
    }
    %c0 = arith.constant 0 : index
    %c0_1 = arith.constant 0 : index
    %c0_2 = arith.constant 0 : index
    %3 = vector.load %arg5[%c0, %c0_1, %c0_2] : memref<1x8x128xf32, #tpu.memory_space<vmem>>, vector<1x8x128xf32>
    %4 = vector.shape_cast %3 : vector<1x8x128xf32> to vector<8x128xf32>
    %c0_3 = arith.constant 0 : index
    %c0_4 = arith.constant 0 : index
    %5 = vector.load %arg7[%c0_3, %c0_4] : memref<128x128xf32, #tpu.memory_space<vmem>>, vector<128x128xf32>
    %cst = arith.constant dense<0.000000e+00> : vector<8x128xf32>
    %6 = tpu.matmul %4, %5, %cst {dimension_numbers = #tpu.dot_dimension_numbers<[1], [0], [0], [1], [0, 0, 1, 1], [], []>} : vector<8x128xf32>, vector<128x128xf32>, vector<8x128xf32> -> vector<8x128xf32>
    %c0_5 = arith.constant 0 : index
    %c0_6 = arith.constant 0 : index
    %7 = vector.load %arg8[%c0_5, %c0_6] : memref<1x128xf32, #tpu.memory_space<vmem>>, vector<1x128xf32>
    %8 = vector.broadcast %7 : vector<1x128xf32> to vector<8x128xf32>
    %9 = arith.addf %6, %8 : vector<8x128xf32>
    %c0_7 = arith.constant 0 : index
    %c0_8 = arith.constant 0 : index
    %10 = vector.load %arg11[%c0_7, %c0_8] : memref<8x128xf32, #tpu.memory_space<vmem>>, vector<8x128xf32>
    %11 = vector.shape_cast %10 : vector<8x128xf32> to vector<8x1x128xf32>
    %12 = vector.shape_cast %9 : vector<8x128xf32> to vector<1x8x128xf32>
    %13 = vector.broadcast %11 : vector<8x1x128xf32> to vector<8x8x128xf32>
    %14 = vector.broadcast %12 : vector<1x8x128xf32> to vector<8x8x128xf32>
    %15 = arith.addf %13, %14 : vector<8x8x128xf32>
    %16 = math.tanh %15 : vector<8x8x128xf32>
    %c0_9 = arith.constant 0 : index
    %c0_10 = arith.constant 0 : index
    %17 = vector.load %arg9[%c0_9, %c0_10] : memref<1x128xf32, #tpu.memory_space<vmem>>, vector<1x128xf32>
    %18 = vector.shape_cast %17 : vector<1x128xf32> to vector<1x1x128xf32>
    %19 = vector.broadcast %18 : vector<1x1x128xf32> to vector<8x8x128xf32>
    %20 = arith.mulf %16, %19 : vector<8x8x128xf32>
    %cst_11 = arith.constant dense<0.000000e+00> : vector<8x8xf32>
    %21 = vector.multi_reduction <add>, %20, %cst_11 [2] : vector<8x8x128xf32> to vector<8x8xf32>
    %c0_12 = arith.constant 0 : index
    %c0_13 = arith.constant 0 : index
    %22 = memref.load %arg3[%c0_12, %c0_13] : memref<1x1xf32, #tpu.memory_space<smem>>
    %23 = vector.broadcast %22 : f32 to vector<8x8xf32>
    %24 = arith.addf %21, %23 : vector<8x8xf32>
    %25 = arith.negf %24 : vector<8x8xf32>
    %26 = math.exp %25 : vector<8x8xf32>
    %cst_14 = arith.constant 1.000000e+00 : f32
    %27 = vector.broadcast %cst_14 : f32 to vector<8x8xf32>
    %28 = arith.addf %27, %26 : vector<8x8xf32>
    %29 = arith.divf %27, %28 : vector<8x8xf32>
    %c0_15 = arith.constant 0 : index
    %c0_16 = arith.constant 0 : index
    %c0_17 = arith.constant 0 : index
    %30 = vector.load %arg10[%c0_15, %c0_16, %c0_17] : memref<1x8x128xf32, #tpu.memory_space<vmem>>, vector<1x8x128xf32>
    %31 = vector.shape_cast %30 : vector<1x8x128xf32> to vector<8x128xf32>
    %cst_18 = arith.constant dense<0.000000e+00> : vector<8x128xf32>
    %32 = tpu.matmul %29, %4, %cst_18 {dimension_numbers = #tpu.dot_dimension_numbers<[1], [0], [0], [1], [0, 0, 1, 1], [], []>} : vector<8x8xf32>, vector<8x128xf32>, vector<8x128xf32> -> vector<8x128xf32>
    %33 = arith.addf %31, %32 : vector<8x128xf32>
    %c0_19 = arith.constant 0 : index
    %c0_20 = arith.constant 0 : index
    %c0_21 = arith.constant 0 : index
    %34 = vector.load %arg10[%c0_19, %c0_20, %c0_21] : memref<1x8x128xf32, #tpu.memory_space<vmem>>, vector<1x8x128xf32>
    %35 = vector.shape_cast %34 : vector<1x8x128xf32> to vector<8x128xf32>
    %36 = vector.shape_cast %33 : vector<8x128xf32> to vector<1x8x128xf32>
    tpu.vector_store %arg10[%c0_19, %c0_20, %c0_21], %36 {strides = array<i32>} : memref<1x8x128xf32, #tpu.memory_space<vmem>>, vector<1x8x128xf32>,
    return
  }
  func.func @transform_0(%arg0: i32, %arg1: i32, %arg2: i32) -> (i32, i32) {
    %c0_i32 = arith.constant 0 : i32
    %c0_i32_0 = arith.constant 0 : i32
    %c0_i32_1 = arith.constant 0 : i32
    return %c0_i32, %c0_i32_0 : i32, i32
  }
  func.func @transform_1(%arg0: i32, %arg1: i32, %arg2: i32) -> (i32, i32, i32) {
    %c0_i32 = arith.constant 0 : i32
    %c0_i32_0 = arith.constant 0 : i32
    return %arg0, %arg1, %c0_i32 : i32, i32, i32
  }
  func.func @transform_2(%arg0: i32, %arg1: i32, %arg2: i32) -> (i32, i32, i32) {
    %c0_i32 = arith.constant 0 : i32
    %c0_i32_0 = arith.constant 0 : i32
    return %arg0, %arg2, %c0_i32 : i32, i32, i32
  }
  func.func @transform_3(%arg0: i32, %arg1: i32, %arg2: i32) -> (i32, i32) {
    %c0_i32 = arith.constant 0 : i32
    %c0_i32_0 = arith.constant 0 : i32
    %c0_i32_1 = arith.constant 0 : i32
    return %c0_i32, %c0_i32_0 : i32, i32
  }
  func.func @transform_4(%arg0: i32, %arg1: i32, %arg2: i32) -> (i32, i32) {
    %c0_i32 = arith.constant 0 : i32
    %c0_i32_0 = arith.constant 0 : i32
    %c0_i32_1 = arith.constant 0 : i32
    return %c0_i32, %c0_i32_0 : i32, i32
  }
  func.func @transform_5(%arg0: i32, %arg1: i32, %arg2: i32) -> (i32, i32) {
    %c0_i32 = arith.constant 0 : i32
    %c0_i32_0 = arith.constant 0 : i32
    %c0_i32_1 = arith.constant 0 : i32
    return %c0_i32, %c0_i32_0 : i32, i32
  }
  func.func @transform_6(%arg0: i32, %arg1: i32, %arg2: i32) -> (i32, i32) {
    %c0_i32 = arith.constant 0 : i32
    %c0_i32_0 = arith.constant 0 : i32
    %c0_i32_1 = arith.constant 0 : i32
    return %c0_i32, %c0_i32_0 : i32, i32
  }
  func.func @transform_7(%arg0: i32, %arg1: i32, %arg2: i32) -> (i32, i32, i32) {
    %c0_i32 = arith.constant 0 : i32
    %c0_i32_0 = arith.constant 0 : i32
    return %arg0, %arg1, %c0_i32 : i32, i32, i32
  }
}

</mosaic_0001>

<llo_original>
// kernel: additive_attention.1
$region0: #{additive_attention.1}
  #allocation0 [shape = 'u32[]', space=smem, size = 0x4, offset = 0x4, fixed_abs, tag = 'smem constant byte address 0x4 - core index']
  #allocation1 [shape = 'u32[144,128]{1,0:T(1,128)}', space=vmem, size = 0x12000, scoped, tag = 'internal scratch']
  #allocation2 [shape = 'f32[8,128]{1,0:T(8,128)}', space=vmem, size = 0x1000, scoped, tag = 'scratch operand']
  #allocation3 [shape = 'f32[1,1]{1,0:T(1,128)S(6)}', space=smem, size = 0x200, scoped, tag = 'scoped memory for additive_attention.1']
  %s0 = inlined_call_operand.<no memory space> [shape: f32[1,1], index: 0, kind: input, shape index: {}]
  %s1 = inlined_call_operand.vmem [shape: f32[2,8,128], index: 1, kind: input, shape index: {}, may-alias: {1,2}]
  %s2 = inlined_call_operand.vmem [shape: f32[2,8,128], index: 2, kind: input, shape index: {}, may-alias: {1,2}]
  %s3 = inlined_call_operand.vmem [shape: f32[128,128], index: 3, kind: input, shape index: {}]
  %s4 = inlined_call_operand.vmem [shape: f32[128,128], index: 4, kind: input, shape index: {}]
  %s5 = inlined_call_operand.vmem [shape: f32[1,128], index: 5, kind: input, shape index: {}]
  %s6 = inlined_call_operand.vmem [shape: f32[1,128], index: 6, kind: input, shape index: {}]
  %s7 = inlined_call_operand.hbm [shape: f32[2,8,128], index: 7, kind: output, shape index: {}]
  %s8 = sld [smem:[#allocation0]]
  $region65: #{additive_attention.1} parent=0
    _
  %s10 = ssub.s32 1, %s8
  %s11 = scalar_select 0, %s10, %s8
  %12 = sst [smem:[#allocation3]] %s0
  $region1: #{additive_attention.1} parent=0
    #allocation4 [shape = 'u8[8192]{0}', space=vmem, size = 0x2000, scoped, tag = 'output window, operand 0']
    #allocation5 [shape = 's32[2]{0}', space=sflag, size = 0x8, scoped, tag = 'scoped memory for additive_attention.1']
    %13 = vsyncpa [#allocation5], 0
    %s14 = scalar_lea.sflag [#allocation5], 1
    %15 = vsyncpa %s14, 0
    loop: start=0, step=1, limit=4
    $region2: #{additive_attention.1} parent=1 // loop_pre_header
      _
    $region3: #{additive_attention.1} parent=1 // loop_header
      %s17 = sphi 0, %s21
      %p18 = scmp.ge.s32.totalorder %s17, 4
      %s24 = sphi 0, %s43
      %s25 = sphi 0, %s39
      %s26 = sphi 0, %s35
      %s27 = sphi 0, %s24
      %s28 = sphi 0, %s25
      %s29 = sphi 0, %s26
      %s30 = sphi 0, %s27
      %s31 = sphi 0, %s28
      %s32 = sphi 0, %s29
      %s44 = sphi 0, %s44
      %s46 = sphi 0, %s44
      %s47 = sphi 0, %s46
      %s61 = sphi 0, %s47
      %s69 = sphi 0, %s71
      %s72 = sphi 0, %s69
      %s73 = sphi 0, %s72
      %s89 = sphi 0, %s73
      %s97 = sphi 0, %s99
      %s100 = sphi 0, %s97
      %s101 = sphi 0, %s100
      %s117 = sphi 0, %s101
      %s121 = sphi 0, %s121
      %s123 = sphi 0, %s121
      %s124 = sphi 0, %s123
      %s138 = sphi 0, %s124
      %s142 = sphi 0, %s142
      %s144 = sphi 0, %s142
      %s145 = sphi 0, %s144
      %s159 = sphi 0, %s145
      %s163 = sphi 0, %s163
      %s165 = sphi 0, %s163
      %s166 = sphi 0, %s165
      %s180 = sphi 0, %s166
      %s184 = sphi 0, %s184
      %s186 = sphi 0, %s184
      %s187 = sphi 0, %s186
      %s201 = sphi 0, %s187
      %s209 = sphi 0, %s211
      %s212 = sphi 0, %s209
      %s213 = sphi 0, %s212
      %s229 = sphi 0, %s213
    $region4: #{additive_attention.1} parent=1 // loop_header_branch
      %20 = sbr.rel (%p18) target = $region8
    $region5: #{additive_attention.1} parent=1 // loop_body
      %s22 = ssub.s32 %s17, 1
      %s23 = ssub.s32 %s17, 2
      %s33 = sadd.s32 1, %s26
      %p34 = scmp.ge.s32.totalorder %s33, 1
      %s35 = scalar_select %p34, 0, %s33
      %s36 = sadd.s32 1, %s25
      %s37 = scalar_select %p34, %s36, %s25
      %p38 = scmp.ge.s32.totalorder %s37, 1
      %s39 = scalar_select %p38, 0, %s37
      %s40 = sadd.s32 1, %s24
      %s41 = scalar_select %p38, %s40, %s24
      %p42 = scmp.ge.s32.totalorder %s41, 2
      %s43 = scalar_select %p42, 0, %s41
      %s45 = sadd.s32 %s44, 1
      %p48 = scmp.eq.s32.totalorder %s17, 1
      %p49 = scmp.ne.s32.totalorder %s44, %s46
      %p50 = scmp.eq.s32.totalorder %s17, 0
      %p51 = por %p49, %p50
      %p52 = scmp.ne.s32.totalorder %s44, %s46
      %p53 = scmp.eq.s32.totalorder %s22, 1
      %p54 = por %p52, %p53
      %p55 = scmp.ne.s32.totalorder %s46, %s47
      %p56 = scmp.eq.s32.totalorder %s22, 0
      %p57 = por %p55, %p56
      %p58 = scmp.ne.s32.totalorder %s46, %s47
      %p59 = scmp.eq.s32.totalorder %s23, 1
      %p60 = por %p58, %p59
      %p62 = scmp.ne.s32.totalorder %s47, %s61
      %p63 = scmp.eq.s32.totalorder %s23, 0
      %p64 = por %p62, %p63
      %s65 = ssub.s32 %s24, %s43
      %s66 = ssub.s32 %s25, %s39
      %s67 = sor.u32 %s65, %s66
      %p68 = scmp.eq.s32.totalorder %s67, 0
      %s70 = sadd.s32 %s69, 1
      %s71 = scalar_select %p68, %s69, %s70
      %p74 = pneg %p68
      %p75 = scmp.eq.s32.totalorder %s17, 1
      %p76 = por %p74, %p75
      %p77 = scmp.ne.s32.totalorder %s69, %s72
      %p78 = scmp.eq.s32.totalorder %s17, 0
      %p79 = por %p77, %p78
      %p80 = scmp.ne.s32.totalorder %s69, %s72
      %p81 = scmp.eq.s32.totalorder %s22, 1
      %p82 = por %p80, %p81
      %p83 = scmp.ne.s32.totalorder %s72, %s73
      %p84 = scmp.eq.s32.totalorder %s22, 0
      %p85 = por %p83, %p84
      %p86 = scmp.ne.s32.totalorder %s72, %s73
      %p87 = scmp.eq.s32.totalorder %s23, 1
      %p88 = por %p86, %p87
      %p90 = scmp.ne.s32.totalorder %s73, %s89
      %p91 = scmp.eq.s32.totalorder %s23, 0
      %p92 = por %p90, %p91
      %s93 = ssub.s32 %s24, %s43
      %s94 = ssub.s32 %s26, %s35
      %s95 = sor.u32 %s93, %s94
      %p96 = scmp.eq.s32.totalorder %s95, 0
      %s98 = sadd.s32 %s97, 1
      %s99 = scalar_select %p96, %s97, %s98
      %p102 = pneg %p96
      %p103 = scmp.eq.s32.totalorder %s17, 1
      %p104 = por %p102, %p103
      %p105 = scmp.ne.s32.totalorder %s97, %s100
      %p106 = scmp.eq.s32.totalorder %s17, 0
      %p107 = por %p105, %p106
      %p108 = scmp.ne.s32.totalorder %s97, %s100
      %p109 = scmp.eq.s32.totalorder %s22, 1
      %p110 = por %p108, %p109
      %p111 = scmp.ne.s32.totalorder %s100, %s101
      %p112 = scmp.eq.s32.totalorder %s22, 0
      %p113 = por %p111, %p112
      %p114 = scmp.ne.s32.totalorder %s100, %s101
      %p115 = scmp.eq.s32.totalorder %s23, 1
      %p116 = por %p114, %p115
      %p118 = scmp.ne.s32.totalorder %s101, %s117
      %p119 = scmp.eq.s32.totalorder %s23, 0
      %p120 = por %p118, %p119
      %s122 = sadd.s32 %s121, 1
      %p125 = scmp.eq.s32.totalorder %s17, 1
      %p126 = scmp.ne.s32.totalorder %s121, %s123
      %p127 = scmp.eq.s32.totalorder %s17, 0
      %p128 = por %p126, %p127
      %p129 = scmp.ne.s32.totalorder %s121, %s123
      %p130 = scmp.eq.s32.totalorder %s22, 1
      %p131 = por %p129, %p130
      %p132 = scmp.ne.s32.totalorder %s123, %s124
      %p133 = scmp.eq.s32.totalorder %s22, 0
      %p134 = por %p132, %p133
      %p135 = scmp.ne.s32.totalorder %s123, %s124
      %p136 = scmp.eq.s32.totalorder %s23, 1
      %p137 = por %p135, %p136
      %p139 = scmp.ne.s32.totalorder %s124, %s138
      %p140 = scmp.eq.s32.totalorder %s23, 0
      %p141 = por %p139, %p140
      %s143 = sadd.s32 %s142, 1
      %p146 = scmp.eq.s32.totalorder %s17, 1
      %p147 = scmp.ne.s32.totalorder %s142, %s144
      %p148 = scmp.eq.s32.totalorder %s17, 0
      %p149 = por %p147, %p148
      %p150 = scmp.ne.s32.totalorder %s142, %s144
      %p151 = scmp.eq.s32.totalorder %s22, 1
      %p152 = por %p150, %p151
      %p153 = scmp.ne.s32.totalorder %s144, %s145
      %p154 = scmp.eq.s32.totalorder %s22, 0
      %p155 = por %p153, %p154
      %p156 = scmp.ne.s32.totalorder %s144, %s145
      %p157 = scmp.eq.s32.totalorder %s23, 1
      %p158 = por %p156, %p157
      %p160 = scmp.ne.s32.totalorder %s145, %s159
      %p161 = scmp.eq.s32.totalorder %s23, 0
      %p162 = por %p160, %p161
      %s164 = sadd.s32 %s163, 1
      %p167 = scmp.eq.s32.totalorder %s17, 1
      %p168 = scmp.ne.s32.totalorder %s163, %s165
      %p169 = scmp.eq.s32.totalorder %s17, 0
      %p170 = por %p168, %p169
      %p171 = scmp.ne.s32.totalorder %s163, %s165
      %p172 = scmp.eq.s32.totalorder %s22, 1
      %p173 = por %p171, %p172
      %p174 = scmp.ne.s32.totalorder %s165, %s166
      %p175 = scmp.eq.s32.totalorder %s22, 0
      %p176 = por %p174, %p175
      %p177 = scmp.ne.s32.totalorder %s165, %s166
      %p178 = scmp.eq.s32.totalorder %s23, 1
      %p179 = por %p177, %p178
      %p181 = scmp.ne.s32.totalorder %s166, %s180
      %p182 = scmp.eq.s32.totalorder %s23, 0
      %p183 = por %p181, %p182
      %s185 = sadd.s32 %s184, 1
      %p188 = scmp.eq.s32.totalorder %s17, 1
      %p189 = scmp.ne.s32.totalorder %s184, %s186
      %p190 = scmp.eq.s32.totalorder %s17, 0
      %p191 = por %p189, %p190
      %p192 = scmp.ne.s32.totalorder %s184, %s186
      %p193 = scmp.eq.s32.totalorder %s22, 1
      %p194 = por %p192, %p193
      %p195 = scmp.ne.s32.totalorder %s186, %s187
      %p196 = scmp.eq.s32.totalorder %s22, 0
      %p197 = por %p195, %p196
      %p198 = scmp.ne.s32.totalorder %s186, %s187
      %p199 = scmp.eq.s32.totalorder %s23, 1
      %p200 = por %p198, %p199
      %p202 = scmp.ne.s32.totalorder %s187, %s201
      %p203 = scmp.eq.s32.totalorder %s23, 0
      %p204 = por %p202, %p203
      %s205 = ssub.s32 %s24, %s43
      %s206 = ssub.s32 %s25, %s39
      %s207 = sor.u32 %s205, %s206
      %p208 = scmp.eq.s32.totalorder %s207, 0
      %s210 = sadd.s32 %s209, 1
      %s211 = scalar_select %p208, %s209, %s210
      %p214 = pneg %p208
      %p215 = scmp.eq.s32.totalorder %s17, 1
      %p216 = por %p214, %p215
      %p217 = scmp.ne.s32.totalorder %s209, %s212
      %p218 = scmp.eq.s32.totalorder %s17, 0
      %p219 = por %p217, %p218
      %p220 = scmp.ne.s32.totalorder %s209, %s212
      %p221 = scmp.eq.s32.totalorder %s22, 1
      %p222 = por %p220, %p221
      %p223 = scmp.ne.s32.totalorder %s212, %s213
      %p224 = scmp.eq.s32.totalorder %s22, 0
      %p225 = por %p223, %p224
      %p226 = scmp.ne.s32.totalorder %s212, %s213
      %p227 = scmp.eq.s32.totalorder %s23, 1
      %p228 = por %p226, %p227
      %p230 = scmp.ne.s32.totalorder %s213, %s229
      %p231 = scmp.eq.s32.totalorder %s23, 0
      %p232 = por %p230, %p231
      %p233 = scmp.le.s32.totalorder 1, %s17
      %p234 = scmp.lt.s32.totalorder %s17, 3
      %p235 = pnand %p233, %p234
      %p236 = pneg %p235
      // Predicated region
      $region9: #{additive_attention.1} parent=5 // pred_check
        _
      $region10: #{additive_attention.1} parent=5 // pred_check_branch
        %238 = sbr.rel (%p235) target = $region12
      $region11: #{additive_attention.1} parent=5 // pred_region
        %s239 = ssub.s32 %s17, 1
        // Predicated region
        $region13: #{additive_attention.1} parent=11 // pred_check
          %p240 = pneg %p57
        $region14: #{additive_attention.1} parent=11 // pred_check_branch
          %242 = sbr.rel (%p240) target = $region16
        $region15: #{additive_attention.1} parent=11 // pred_region
          _
        $region16: #{additive_attention.1} parent=11 // pred_fallthru
          _
        // Predicated region
        $region17: #{additive_attention.1} parent=11 // pred_check
          %p243 = pneg %p134
        $region18: #{additive_attention.1} parent=11 // pred_check_branch
          %245 = sbr.rel (%p243) target = $region20
        $region19: #{additive_attention.1} parent=11 // pred_region
          _
        $region20: #{additive_attention.1} parent=11 // pred_fallthru
          _
        // Predicated region
        $region21: #{additive_attention.1} parent=11 // pred_check
          %p246 = pneg %p155
        $region22: #{additive_attention.1} parent=11 // pred_check_branch
          %248 = sbr.rel (%p246) target = $region24
        $region23: #{additive_attention.1} parent=11 // pred_region
          _
        $region24: #{additive_attention.1} parent=11 // pred_fallthru
          _
        // Predicated region
        $region25: #{additive_attention.1} parent=11 // pred_check
          %p249 = pneg %p176
        $region26: #{additive_attention.1} parent=11 // pred_check_branch
          %251 = sbr.rel (%p249) target = $region28
        $region27: #{additive_attention.1} parent=11 // pred_region
          _
        $region28: #{additive_attention.1} parent=11 // pred_fallthru
          _
        // Predicated region
        $region29: #{additive_attention.1} parent=11 // pred_check
          %p252 = pneg %p197
        $region30: #{additive_attention.1} parent=11 // pred_check_branch
          %254 = sbr.rel (%p252) target = $region32
        $region31: #{additive_attention.1} parent=11 // pred_region
          _
        $region32: #{additive_attention.1} parent=11 // pred_fallthru
          _
      $region12: #{additive_attention.1} parent=5 // pred_fallthru
        _
      %p255 = scmp.lt.s32.totalorder %s17, 2
      // Predicated region
      $region33: #{additive_attention.1} parent=5 // pred_check
        %p256 = pneg %p255
      $region34: #{additive_attention.1} parent=5 // pred_check_branch
        %258 = sbr.rel (%p256) target = $region36
      $region35: #{additive_attention.1} parent=5 // pred_region
        // Predicated region
        $region37: #{additive_attention.1} parent=35 // pred_check
          %p259 = pneg %p79
        $region38: #{additive_attention.1} parent=35 // pred_check_branch
          %261 = sbr.rel (%p259) target = $region40
        $region39: #{additive_attention.1} parent=35 // pred_region
          %p262 = scmp.lt.s32.totalorder %s24, 1
          %s263 = scalar_select %p262, %s24, 1
          %p264 = scmp.lt.s32.totalorder %s25, 0
          %s265 = scalar_select %p264, %s25, 0
          %s266 = sadd.s32 %s265, %s263
          %s267 = smul.addr %s266, 8
          %s268 = scalar_lea.vmem %s1, %s267
        $region40: #{additive_attention.1} parent=35 // pred_fallthru
          _
        // Predicated region
        $region41: #{additive_attention.1} parent=35 // pred_check
          %p269 = pneg %p107
        $region42: #{additive_attention.1} parent=35 // pred_check_branch
          %271 = sbr.rel (%p269) target = $region44
        $region43: #{additive_attention.1} parent=35 // pred_region
          %p272 = scmp.lt.s32.totalorder %s24, 1
          %s273 = scalar_select %p272, %s24, 1
          %p274 = scmp.lt.s32.totalorder %s26, 0
          %s275 = scalar_select %p274, %s26, 0
          %s276 = sadd.s32 %s275, %s273
          %s277 = smul.addr %s276, 8
          %s278 = scalar_lea.vmem %s2, %s277
        $region44: #{additive_attention.1} parent=35 // pred_fallthru
          _
      $region36: #{additive_attention.1} parent=5 // pred_fallthru
        _
      %p279 = scmp.le.s32.totalorder 1, %s17
      %p280 = scmp.lt.s32.totalorder %s17, 3
      %p281 = pnand %p279, %p280
      %p282 = pneg %p281
      // Predicated region
      $region45: #{additive_attention.1} parent=5 // pred_check
        _
      $region46: #{additive_attention.1} parent=5 // pred_check_branch
        %284 = sbr.rel (%p281) target = $region48
      $region47: #{additive_attention.1} parent=5 // pred_region
        %s285 = ssub.s32 %s17, 1
        %p286 = pneg %p57
        %p287 = pneg %p54
        %p288 = scmp.lt.s32.totalorder %s27, 1
        %s289 = scalar_select %p288, %s27, 1
        %p290 = scmp.lt.s32.totalorder %s28, 0
        %s291 = scalar_select %p290, %s28, 0
        %s292 = sadd.s32 %s291, %s289
        %s293 = smul.addr %s292, 8
        %s294 = scalar_lea.vmem %s1, %s293
        %p295 = pneg %p85
        %p296 = pneg %p82
        %p297 = scmp.lt.s32.totalorder %s27, 1
        %s298 = scalar_select %p297, %s27, 1
        %p299 = scmp.lt.s32.totalorder %s29, 0
        %s300 = scalar_select %p299, %s29, 0
        %s301 = sadd.s32 %s300, %s298
        %s302 = smul.addr %s301, 8
        %s303 = scalar_lea.vmem %s2, %s302
        %p304 = pneg %p113
        %p305 = pneg %p110
        %p306 = pneg %p134
        %p307 = pneg %p131
        %p308 = pneg %p155
        %p309 = pneg %p152
        %p310 = pneg %p176
        %p311 = pneg %p173
        %p312 = pneg %p197
        %p313 = pneg %p194
        %p314 = pneg %p225
        %p315 = pneg %p222
        %s316 = sand.u32 %s212, 1
        %s317 = scalar_lea.sflag [#allocation5], %s316
        %s318 = sand.u32 %s212, 1
        %s319 = smul.addr %s318, 8
        %s320 = scalar_lea.vmem [#allocation4], %s319
        %p321 = scmp.lt.s32.totalorder %s27, 1
        %s322 = scalar_select %p321, %s27, 1
        %p323 = scmp.lt.s32.totalorder %s28, 0
        %s324 = scalar_select %p323, %s28, 0
        %s325 = sadd.s32 %s324, %s322
        %s326 = smul.addr %s325, 8
        %s327 = scalar_lea.vmem %s1, %s326
        %p328 = scmp.lt.s32.totalorder %s27, 1
        %s329 = scalar_select %p328, %s27, 1
        %p330 = scmp.lt.s32.totalorder %s29, 0
        %s331 = scalar_select %p330, %s29, 0
        %s332 = sadd.s32 %s331, %s329
        %s333 = smul.addr %s332, 8
        %s334 = scalar_lea.vmem %s2, %s333
        %p335 = scmp.eq.s32.totalorder %s29, 0
        // Predicated region
        $region49: #{additive_attention.1} parent=47 // pred_check
          %p336 = pneg %p335
        $region50: #{additive_attention.1} parent=47 // pred_check_branch
          %338 = sbr.rel (%p336) target = $region52
        $region51: #{additive_attention.1} parent=47 // pred_region
          %v339 = vld [vmem:[%s327] sm:$0xff]
          %v340 = vld [vmem:[%s3] sm:$0xff]
          %v341 = vld [vmem:[%s3 + $0x8] sm:$0xff]
          %v342 = vld [vmem:[%s3 + $0x10] sm:$0xff]
          %v343 = vld [vmem:[%s3 + $0x18] sm:$0xff]
          %v344 = vld [vmem:[%s3 + $0x20] sm:$0xff]
          %v345 = vld [vmem:[%s3 + $0x28] sm:$0xff]
          %v346 = vld [vmem:[%s3 + $0x30] sm:$0xff]
          %v347 = vld [vmem:[%s3 + $0x38] sm:$0xff]
          %v348 = vld [vmem:[%s3 + $0x40] sm:$0xff]
          %v349 = vld [vmem:[%s3 + $0x48] sm:$0xff]
          %v350 = vld [vmem:[%s3 + $0x50] sm:$0xff]
          %v351 = vld [vmem:[%s3 + $0x58] sm:$0xff]
          %v352 = vld [vmem:[%s3 + $0x60] sm:$0xff]
          %v353 = vld [vmem:[%s3 + $0x68] sm:$0xff]
          %v354 = vld [vmem:[%s3 + $0x70] sm:$0xff]
          %v355 = vld [vmem:[%s3 + $0x78] sm:$0xff]
          %356 = vmatprep.subr.mxu0 0.0
          %357 = vmatpush1.msra.mxu0 %v340
          %358 = vmatprep.subr.mxu0 0.0
          %359 = vmatpush1.msra.mxu0 %v341
          %360 = vmatprep.subr.mxu0 0.0
          %361 = vmatpush1.msra.mxu0 %v342
          %362 = vmatprep.subr.mxu0 0.0
          %363 = vmatpush1.msra.mxu0 %v343
          %364 = vmatprep.subr.mxu0 0.0
          %365 = vmatpush1.msra.mxu0 %v344
          %366 = vmatprep.subr.mxu0 0.0
          %367 = vmatpush1.msra.mxu0 %v345
          %368 = vmatprep.subr.mxu0 0.0
          %369 = vmatpush1.msra.mxu0 %v346
          %370 = vmatprep.subr.mxu0 0.0
          %371 = vmatpush1.msra.mxu0 %v347
          %372 = vmatprep.subr.mxu0 0.0
          %373 = vmatpush1.msra.mxu0 %v348
          %374 = vmatprep.subr.mxu0 0.0
          %375 = vmatpush1.msra.mxu0 %v349
          %376 = vmatprep.subr.mxu0 0.0
          %377 = vmatpush1.msra.mxu0 %v350
          %378 = vmatprep.subr.mxu0 0.0
          %379 = vmatpush1.msra.mxu0 %v351
          %380 = vmatprep.subr.mxu0 0.0
          %381 = vmatpush1.msra.mxu0 %v352
          %382 = vmatprep.subr.mxu0 0.0
          %383 = vmatpush1.msra.mxu0 %v353
          %384 = vmatprep.subr.mxu0 0.0
          %385 = vmatpush1.msra.mxu0 %v354
          %386 = vmatprep.subr.mxu0 0.0
          %387 = vmatpush1.msra.mxu0 %v355
          %388 = vmatprep.subr.mxu0 0.0
          %389 = vmatpush1.msra.mxu0 0.0
          %390 = vmatprep.subr.mxu0 0.0
          %391 = vmatpush1.msra.mxu0 0.0
          %392 = vmatprep.subr.mxu0 0.0
          %393 = vmatpush1.msra.mxu0 0.0
          %394 = vmatprep.subr.mxu0 0.0
          %395 = vmatpush1.msra.mxu0 0.0
          %396 = vmatprep.subr.mxu0 0.0
          %397 = vmatpush1.msra.mxu0 0.0
          %398 = vmatprep.subr.mxu0 0.0
          %399 = vmatpush1.msra.mxu0 0.0
          %400 = vmatprep.subr.mxu0 0.0
          %401 = vmatpush1.msra.mxu0 0.0
          %402 = vmatprep.subr.mxu0 0.0
          %403 = vmatpush1.msra.mxu0 0.0
          %404 = vmatprep.subr.mxu0 0.0
          %405 = vmatpush1.msra.mxu0 0.0
          %406 = vmatprep.subr.mxu0 0.0
          %407 = vmatpush1.msra.mxu0 0.0
          %408 = vmatprep.subr.mxu0 0.0
          %409 = vmatpush1.msra.mxu0 0.0
          %410 = vmatprep.subr.mxu0 0.0
          %411 = vmatpush1.msra.mxu0 0.0
          %412 = vmatprep.subr.mxu0 0.0
          %413 = vmatpush1.msra.mxu0 0.0
          %414 = vmatprep.subr.mxu0 0.0
          %415 = vmatpush1.msra.mxu0 0.0
          %416 = vmatprep.subr.mxu0 0.0
          %417 = vmatpush1.msra.mxu0 0.0
          %418 = vmatprep.subr.mxu0 0.0
          %419 = vmatpush1.msra.mxu0 0.0
          %420 = vmatprep.mubr.f32.mxu0 0.0
          %421 = vmatmul.mubr.f32.gmra.mrb[0].mxu0 %v339
          %v422 = vpop.f32.mrb[0].mxu0
          %v423 = vadd.f32 0.0, %v422
          %v424 = vpop.f32.mrb[0].mxu0
          %425 = vdwg.mxu0
          %426 = vst [vmem:[#allocation2] sm:$0xff] %v423
          %427 = vst [vmem:[%s320] sm:$0xff] 0.0
        $region52: #{additive_attention.1} parent=47 // pred_fallthru
          _
        %v428 = vld [vmem:[%s334] sm:$0xff]
        %v429 = vld [vmem:[%s4] sm:$0xff]
        %v430 = vld [vmem:[%s4 + $0x8] sm:$0xff]
        %v431 = vld [vmem:[%s4 + $0x10] sm:$0xff]
        %v432 = vld [vmem:[%s4 + $0x18] sm:$0xff]
        %v433 = vld [vmem:[%s4 + $0x20] sm:$0xff]
        %v434 = vld [vmem:[%s4 + $0x28] sm:$0xff]
        %v435 = vld [vmem:[%s4 + $0x30] sm:$0xff]
        %v436 = vld [vmem:[%s4 + $0x38] sm:$0xff]
        %v437 = vld [vmem:[%s4 + $0x40] sm:$0xff]
        %v438 = vld [vmem:[%s4 + $0x48] sm:$0xff]
        %v439 = vld [vmem:[%s4 + $0x50] sm:$0xff]
        %v440 = vld [vmem:[%s4 + $0x58] sm:$0xff]
        %v441 = vld [vmem:[%s4 + $0x60] sm:$0xff]
        %v442 = vld [vmem:[%s4 + $0x68] sm:$0xff]
        %v443 = vld [vmem:[%s4 + $0x70] sm:$0xff]
        %v444 = vld [vmem:[%s4 + $0x78] sm:$0xff]
        %v445 = vld [vmem:[%s5] sm:$0x1]
        %v447 = vlaneseq
        %v448 = vshrl.u32 %v447, 7
        %v449 = vsub.s32 0, %v448
        %v450 = vrot.slane %v445, %v449
        %452 = vmatprep.subr.mxu0 0.0
        %453 = vmatpush1.msra.mxu0 %v429
        %454 = vmatprep.subr.mxu0 0.0
        %455 = vmatpush1.msra.mxu0 %v430
        %456 = vmatprep.subr.mxu0 0.0
        %457 = vmatpush1.msra.mxu0 %v431
        %458 = vmatprep.subr.mxu0 0.0
        %459 = vmatpush1.msra.mxu0 %v432
        %460 = vmatprep.subr.mxu0 0.0
        %461 = vmatpush1.msra.mxu0 %v433
        %462 = vmatprep.subr.mxu0 0.0
        %463 = vmatpush1.msra.mxu0 %v434
        %464 = vmatprep.subr.mxu0 0.0
        %465 = vmatpush1.msra.mxu0 %v435
        %466 = vmatprep.subr.mxu0 0.0
        %467 = vmatpush1.msra.mxu0 %v436
        %468 = vmatprep.subr.mxu0 0.0
        %469 = vmatpush1.msra.mxu0 %v437
        %470 = vmatprep.subr.mxu0 0.0
        %471 = vmatpush1.msra.mxu0 %v438
        %472 = vmatprep.subr.mxu0 0.0
        %473 = vmatpush1.msra.mxu0 %v439
        %474 = vmatprep.subr.mxu0 0.0
        %475 = vmatpush1.msra.mxu0 %v440
        %476 = vmatprep.subr.mxu0 0.0
        %477 = vmatpush1.msra.mxu0 %v441
        %478 = vmatprep.subr.mxu0 0.0
        %479 = vmatpush1.msra.mxu0 %v442
        %480 = vmatprep.subr.mxu0 0.0
        %481 = vmatpush1.msra.mxu0 %v443
        %482 = vmatprep.subr.mxu0 0.0
        %483 = vmatpush1.msra.mxu0 %v444
        %484 = vmatprep.subr.mxu0 0.0
        %485 = vmatpush1.msra.mxu0 0.0
        %486 = vmatprep.subr.mxu0 0.0
        %487 = vmatpush1.msra.mxu0 0.0
        %488 = vmatprep.subr.mxu0 0.0
        %489 = vmatpush1.msra.mxu0 0.0
        %490 = vmatprep.subr.mxu0 0.0
        %491 = vmatpush1.msra.mxu0 0.0
        %492 = vmatprep.subr.mxu0 0.0
        %493 = vmatpush1.msra.mxu0 0.0
        %494 = vmatprep.subr.mxu0 0.0
        %495 = vmatpush1.msra.mxu0 0.0
        %496 = vmatprep.subr.mxu0 0.0
        %497 = vmatpush1.msra.mxu0 0.0
        %498 = vmatprep.subr.mxu0 0.0
        %499 = vmatpush1.msra.mxu0 0.0
        %500 = vmatprep.subr.mxu0 0.0
        %501 = vmatpush1.msra.mxu0 0.0
        %502 = vmatprep.subr.mxu0 0.0
        %503 = vmatpush1.msra.mxu0 0.0
        %504 = vmatprep.subr.mxu0 0.0
        %505 = vmatpush1.msra.mxu0 0.0
        %506 = vmatprep.subr.mxu0 0.0
        %507 = vmatpush1.msra.mxu0 0.0
        %508 = vmatprep.subr.mxu0 0.0
        %509 = vmatpush1.msra.mxu0 0.0
        %510 = vmatprep.subr.mxu0 0.0
        %511 = vmatpush1.msra.mxu0 0.0
        %512 = vmatprep.subr.mxu0 0.0
        %513 = vmatpush1.msra.mxu0 0.0
        %514 = vmatprep.subr.mxu0 0.0
        %515 = vmatpush1.msra.mxu0 0.0
        %516 = vmatprep.mubr.f32.mxu0 0.0
        %517 = vmatmul.mubr.f32.gmra.mrb[0].mxu0 %v428
        %v518 = vpop.f32.mrb[0].mxu0
        %v519 = vadd.f32 %v450, %v518
        %v520 = vpop.f32.mrb[0].mxu0
        %521 = vdwg.mxu0
        %v522 = vld [vmem:[#allocation2] sm:$0xff]
        %v524 = vcombine.high %v522, %v522
        %v526 = vunpack.c.l.s4 1966171168
        %v527 = vunpack.c.0.s8 %v526
        %v528 = vlaneseq
        %v529 = vshrl.u32 %v528, 7
        %v530 = vsub.s32 %v527, %v529
        %v531 = vrot.slane %v522, %v530
        %v533 = vunpack.c.l.s4 1966171168
        %v534 = vunpack.c.0.s8 %v533
        %v535 = vlaneseq
        %v536 = vshrl.u32 %v535, 7
        %v537 = vsub.s32 %v534, %v536
        %v538 = vrot.slane %v524, %v537
        %v539 = vcombine.high %v531, %v531
        %v540 = vcombine.high %v538, %v538
        %v542 = vunpack.c.l.s4 1966171168
        %v543 = vunpack.c.0.s8 %v542
        %v544 = vlaneseq
        %v545 = vshrl.u32 %v544, 7
        %v546 = vsub.s32 %v543, %v545
        %v547 = vrot.slane %v531, %v546
        %v549 = vunpack.c.l.s4 1966171168
        %v550 = vunpack.c.0.s8 %v549
        %v551 = vlaneseq
        %v552 = vshrl.u32 %v551, 7
        %v553 = vsub.s32 %v550, %v552
        %v554 = vrot.slane %v538, %v553
        %v556 = vunpack.c.l.s4 1966171168
        %v557 = vunpack.c.0.s8 %v556
        %v558 = vlaneseq
        %v559 = vshrl.u32 %v558, 7
        %v560 = vsub.s32 %v557, %v559
        %v561 = vrot.slane %v539, %v560
        %v563 = vunpack.c.l.s4 1966171168
        %v564 = vunpack.c.0.s8 %v563
        %v565 = vlaneseq
        %v566 = vshrl.u32 %v565, 7
        %v567 = vsub.s32 %v564, %v566
        %v568 = vrot.slane %v540, %v567
        %v569 = vcombine.high %v547, %v547
        %v570 = vcombine.high %v554, %v554
        %v571 = vcombine.high %v561, %v561
        %v572 = vcombine.high %v568, %v568
        %v573 = vlaneseq
        %v574 = vshrl.u32 %v573, 7
        %v575 = vsub.s32 0, %v574
        %v576 = vrot.slane %v547, %v575
        %v577 = vlaneseq
        %v578 = vshrl.u32 %v577, 7
        %v579 = vsub.s32 0, %v578
        %v580 = vrot.slane %v561, %v579
        %v581 = vlaneseq
        %v582 = vshrl.u32 %v581, 7
        %v583 = vsub.s32 0, %v582
        %v584 = vrot.slane %v569, %v583
        %v585 = vlaneseq
        %v586 = vshrl.u32 %v585, 7
        %v587 = vsub.s32 0, %v586
        %v588 = vrot.slane %v571, %v587
        %v589 = vlaneseq
        %v590 = vshrl.u32 %v589, 7
        %v591 = vsub.s32 0, %v590
        %v592 = vrot.slane %v554, %v591
        %v593 = vlaneseq
        %v594 = vshrl.u32 %v593, 7
        %v595 = vsub.s32 0, %v594
        %v596 = vrot.slane %v568, %v595
        %v597 = vlaneseq
        %v598 = vshrl.u32 %v597, 7
        %v599 = vsub.s32 0, %v598
        %v600 = vrot.slane %v570, %v599
        %v601 = vlaneseq
        %v602 = vshrl.u32 %v601, 7
        %v603 = vsub.s32 0, %v602
        %v604 = vrot.slane %v572, %v603
        %v613 = vadd.f32 %v576, %v519
        %v614 = vadd.f32 %v580, %v519
        %v615 = vadd.f32 %v584, %v519
        %v616 = vadd.f32 %v588, %v519
        %v617 = vadd.f32 %v592, %v519
        %v618 = vadd.f32 %v596, %v519
        %v619 = vadd.f32 %v600, %v519
        %v620 = vadd.f32 %v604, %v519
        %v621 = vtanh.pop %v613
        %v622 = vtanh.pop %v614
        %v623 = vtanh.pop %v615
        %v624 = vtanh.pop %v616
        %v625 = vtanh.pop %v617
        %v626 = vtanh.pop %v618
        %v627 = vtanh.pop %v619
        %v628 = vtanh.pop %v620
        %v629 = vld [vmem:[%s6] sm:$0x1]
        %v631 = vlaneseq
        %v632 = vshrl.u32 %v631, 7
        %v633 = vsub.s32 0, %v632
        %v634 = vrot.slane %v629, %v633
        %v636 = vmul.f32 %v621, %v634
        %v637 = vmul.f32 %v622, %v634
        %v638 = vmul.f32 %v623, %v634
        %v639 = vmul.f32 %v624, %v634
        %v640 = vmul.f32 %v625, %v634
        %v641 = vmul.f32 %v626, %v634
        %v642 = vmul.f32 %v627, %v634
        %v643 = vmul.f32 %v628, %v634
        %644 = vadd.xlane.f32.xlu0 %v636
        %v645 = vpop.xlane.xlu0 %644
        %646 = vadd.xlane.f32.xlu0 %v637
        %v647 = vpop.xlane.xlu0 %646
        %648 = vadd.xlane.f32.xlu0 %v638
        %v649 = vpop.xlane.xlu0 %648
        %650 = vadd.xlane.f32.xlu0 %v639
        %v651 = vpop.xlane.xlu0 %650
        %652 = vadd.xlane.f32.xlu0 %v640
        %v653 = vpop.xlane.xlu0 %652
        %654 = vadd.xlane.f32.xlu0 %v641
        %v655 = vpop.xlane.xlu0 %654
        %656 = vadd.xlane.f32.xlu0 %v642
        %v657 = vpop.xlane.xlu0 %656
        %658 = vadd.xlane.f32.xlu0 %v643
        %v659 = vpop.xlane.xlu0 %658
        %s660 = sld [smem:[#allocation3]]
        %v661 = vstv %s660
        %v662 = vadd.f32 %v645, %v661
        %v663 = vadd.f32 %v647, %v661
        %v664 = vadd.f32 %v649, %v661
        %v665 = vadd.f32 %v651, %v661
        %v666 = vadd.f32 %v653, %v661
        %v667 = vadd.f32 %v655, %v661
        %v668 = vadd.f32 %v657, %v661
        %v669 = vadd.f32 %v659, %v661
        %v670 = vxor.u32 %v662, 2147483648
        %v671 = vxor.u32 %v663, 2147483648
        %v672 = vxor.u32 %v664, 2147483648
        %v673 = vxor.u32 %v665, 2147483648
        %v674 = vxor.u32 %v666, 2147483648
        %v675 = vxor.u32 %v667, 2147483648
        %v676 = vxor.u32 %v668, 2147483648
        %v677 = vxor.u32 %v669, 2147483648
        %v678 = vmul.f32 %v670, 1.442695
        %v679 = vpow.pop %v678
        %v680 = vmul.f32 %v671, 1.442695
        %v681 = vpow.pop %v680
        %v682 = vmul.f32 %v672, 1.442695
        %v683 = vpow.pop %v682
        %v684 = vmul.f32 %v673, 1.442695
        %v685 = vpow.pop %v684
        %v686 = vmul.f32 %v674, 1.442695
        %v687 = vpow.pop %v686
        %v688 = vmul.f32 %v675, 1.442695
        %v689 = vpow.pop %v688
        %v690 = vmul.f32 %v676, 1.442695
        %v691 = vpow.pop %v690
        %v692 = vmul.f32 %v677, 1.442695
        %v693 = vpow.pop %v692
        %v694 = vadd.f32 %v679, 1.0
        %v695 = vadd.f32 %v681, 1.0
        %v696 = vadd.f32 %v683, 1.0
        %v697 = vadd.f32 %v685, 1.0
        %v698 = vadd.f32 %v687, 1.0
        %v699 = vadd.f32 %v689, 1.0
        %v700 = vadd.f32 %v691, 1.0
        %v701 = vadd.f32 %v693, 1.0
        %v702 = vrcp.pop %v694
        %v703 = vmul.f32 1.0, %v702
        %v704 = vrcp.pop %v695
        %v705 = vmul.f32 1.0, %v704
        %v706 = vrcp.pop %v696
        %v707 = vmul.f32 1.0, %v706
        %v708 = vrcp.pop %v697
        %v709 = vmul.f32 1.0, %v708
        %v710 = vrcp.pop %v698
        %v711 = vmul.f32 1.0, %v710
        %v712 = vrcp.pop %v699
        %v713 = vmul.f32 1.0, %v712
        %v714 = vrcp.pop %v700
        %v715 = vmul.f32 1.0, %v714
        %v716 = vrcp.pop %v701
        %v717 = vmul.f32 1.0, %v716
        %v718 = vld [vmem:[%s320] sm:$0xff]
        %v727 = vlaneseq
        %v728 = vand.u32 %v727, 127
        %v729 = vlaneseq
        %v730 = vshrl.u32 %v729, 7
        %v731 = vsub.s32 %v728, %v730
        %v732 = vrot.slane %v703, %v731
        %v733 = vlaneseq
        %v734 = vshrl.u32 %v733, 7
        %v735 = vsub.s32 %v728, %v734
        %v736 = vrot.slane %v705, %v735
        %v737 = vlaneseq
        %v738 = vshrl.u32 %v737, 7
        %v739 = vsub.s32 %v728, %v738
        %v740 = vrot.slane %v707, %v739
        %v741 = vlaneseq
        %v742 = vshrl.u32 %v741, 7
        %v743 = vsub.s32 %v728, %v742
        %v744 = vrot.slane %v709, %v743
        %v745 = vlaneseq
        %v746 = vshrl.u32 %v745, 7
        %v747 = vsub.s32 %v728, %v746
        %v748 = vrot.slane %v711, %v747
        %v749 = vlaneseq
        %v750 = vshrl.u32 %v749, 7
        %v751 = vsub.s32 %v728, %v750
        %v752 = vrot.slane %v713, %v751
        %v753 = vlaneseq
        %v754 = vshrl.u32 %v753, 7
        %v755 = vsub.s32 %v728, %v754
        %v756 = vrot.slane %v715, %v755
        %v757 = vlaneseq
        %v758 = vshrl.u32 %v757, 7
        %v759 = vsub.s32 %v728, %v758
        %v760 = vrot.slane %v717, %v759
        %vm761 = vcmask 1041409
        %v762 = vsel %vm761, %v736, %v732
        %vm763 = vcmask 1042434
        %v764 = vsel %vm763, %v740, %v762
        %vm765 = vcmask 1043459
        %v766 = vsel %vm765, %v744, %v764
        %vm767 = vcmask 1044484
        %v768 = vsel %vm767, %v748, %v766
        %vm769 = vcmask 1045509
        %v770 = vsel %vm769, %v752, %v768
        %vm771 = vcmask 1046534
        %v772 = vsel %vm771, %v756, %v770
        %vm773 = vcmask 1047559
        %v774 = vsel %vm773, %v760, %v772
        %vm775 = vcmask 64512
        %v776 = vsel %vm775, %v774, 0
        %778 = vmatprep.subr.mxu0 0.0
        %779 = vmatpush1.msra.mxu0 %v428
        %780 = vmatprep.subr.mxu0 0.0
        %781 = vmatpush1.msra.mxu0 0.0
        %782 = vmatprep.subr.mxu0 0.0
        %783 = vmatpush1.msra.mxu0 0.0
        %784 = vmatprep.subr.mxu0 0.0
        %785 = vmatpush1.msra.mxu0 0.0
        %786 = vmatprep.subr.mxu0 0.0
        %787 = vmatpush1.msra.mxu0 0.0
        %788 = vmatprep.subr.mxu0 0.0
        %789 = vmatpush1.msra.mxu0 0.0
        %790 = vmatprep.subr.mxu0 0.0
        %791 = vmatpush1.msra.mxu0 0.0
        %792 = vmatprep.subr.mxu0 0.0
        %793 = vmatpush1.msra.mxu0 0.0
        %794 = vmatprep.subr.mxu0 0.0
        %795 = vmatpush1.msra.mxu0 0.0
        %796 = vmatprep.subr.mxu0 0.0
        %797 = vmatpush1.msra.mxu0 0.0
        %798 = vmatprep.subr.mxu0 0.0
        %799 = vmatpush1.msra.mxu0 0.0
        %800 = vmatprep.subr.mxu0 0.0
        %801 = vmatpush1.msra.mxu0 0.0
        %802 = vmatprep.subr.mxu0 0.0
        %803 = vmatpush1.msra.mxu0 0.0
        %804 = vmatprep.subr.mxu0 0.0
        %805 = vmatpush1.msra.mxu0 0.0
        %806 = vmatprep.subr.mxu0 0.0
        %807 = vmatpush1.msra.mxu0 0.0
        %808 = vmatprep.subr.mxu0 0.0
        %809 = vmatpush1.msra.mxu0 0.0
        %810 = vmatprep.subr.mxu0 0.0
        %811 = vmatpush1.msra.mxu0 0.0
        %812 = vmatprep.subr.mxu0 0.0
        %813 = vmatpush1.msra.mxu0 0.0
        %814 = vmatprep.subr.mxu0 0.0
        %815 = vmatpush1.msra.mxu0 0.0
        %816 = vmatprep.subr.mxu0 0.0
        %817 = vmatpush1.msra.mxu0 0.0
        %818 = vmatprep.subr.mxu0 0.0
        %819 = vmatpush1.msra.mxu0 0.0
        %820 = vmatprep.subr.mxu0 0.0
        %821 = vmatpush1.msra.mxu0 0.0
        %822 = vmatprep.subr.mxu0 0.0
        %823 = vmatpush1.msra.mxu0 0.0
        %824 = vmatprep.subr.mxu0 0.0
        %825 = vmatpush1.msra.mxu0 0.0
        %826 = vmatprep.subr.mxu0 0.0
        %827 = vmatpush1.msra.mxu0 0.0
        %828 = vmatprep.subr.mxu0 0.0
        %829 = vmatpush1.msra.mxu0 0.0
        %830 = vmatprep.subr.mxu0 0.0
        %831 = vmatpush1.msra.mxu0 0.0
        %832 = vmatprep.subr.mxu0 0.0
        %833 = vmatpush1.msra.mxu0 0.0
        %834 = vmatprep.subr.mxu0 0.0
        %835 = vmatpush1.msra.mxu0 0.0
        %836 = vmatprep.subr.mxu0 0.0
        %837 = vmatpush1.msra.mxu0 0.0
        %838 = vmatprep.subr.mxu0 0.0
        %839 = vmatpush1.msra.mxu0 0.0
        %840 = vmatprep.subr.mxu0 0.0
        %841 = vmatpush1.msra.mxu0 0.0
        %842 = vmatprep.mubr.f32.mxu0 0.0
        %843 = vmatmul.mubr.f32.gmra.mrb[0].mxu0 %v776
        %v844 = vpop.f32.mrb[0].mxu0
        %v845 = vadd.f32 0.0, %v844
        %v846 = vpop.f32.mrb[0].mxu0
        %847 = vdwg.mxu0
        %v848 = vadd.f32 %v718, %v845
        %849 = vst [vmem:[%s320] sm:$0xff] %v848
        %s850 = sand.u32 %s212, 1
        %s851 = scalar_lea.sflag [#allocation5], %s850
        %s852 = sand.u32 %s212, 1
        %s853 = smul.addr %s852, 8
        %s854 = scalar_lea.vmem [#allocation4], %s853
        // Predicated region
        $region53: #{additive_attention.1} parent=47 // pred_check
          %p855 = pneg %p222
        $region54: #{additive_attention.1} parent=47 // pred_check_branch
          %857 = sbr.rel (%p855) target = $region56
        $region55: #{additive_attention.1} parent=47 // pred_region
          %s859 = ssub.s32 128, 128
          %860 = vsyncadd %s851, %s859
          %s861 = sadd.s32 %s28, %s27
          %s862 = smul.addr %s861, 128
          %s863 = scalar_lea.hbm %s7, %s862
          %s865 = sshll.u32 %s854, 4
          %s866 = int_to_ptr.vmem [resolvable:$true] %s865
          %868 = dma.vmem_to_hbm [thread:$0]  %s866, 128, %s863, %s851
        $region56: #{additive_attention.1} parent=47 // pred_fallthru
          _
      $region48: #{additive_attention.1} parent=5 // pred_fallthru
        _
      %p869 = scmp.le.s32.totalorder 2, %s17
      // Predicated region
      $region57: #{additive_attention.1} parent=5 // pred_check
        %p870 = pneg %p869
      $region58: #{additive_attention.1} parent=5 // pred_check_branch
        %872 = sbr.rel (%p870) target = $region60
      $region59: #{additive_attention.1} parent=5 // pred_region
        %s873 = ssub.s32 %s17, 2
        // Predicated region
        $region61: #{additive_attention.1} parent=59 // pred_check
          %p874 = pneg %p228
        $region62: #{additive_attention.1} parent=59 // pred_check_branch
          %876 = sbr.rel (%p874) target = $region64
        $region63: #{additive_attention.1} parent=59 // pred_region
          %s877 = sand.u32 %s213, 1
          %s878 = scalar_lea.sflag [#allocation5], %s877
          %s879 = sand.u32 %s213, 1
          %s880 = smul.addr %s879, 8
          %s881 = scalar_lea.vmem [#allocation4], %s880
          %882 = dma.done %s878, 128
        $region64: #{additive_attention.1} parent=59 // pred_fallthru
          _
      $region60: #{additive_attention.1} parent=5 // pred_fallthru
        _
    $region6: #{additive_attention.1} parent=1 // loop_footer
      %s21 = sadd.s32 1, %s17
    $region7: #{additive_attention.1} parent=1 // loop_footer_branch
      %16 = sbr.rel target = $region3
    $region8: #{additive_attention.1} parent=1 // loop_exit
      _
    %883 = vsyncpa [#allocation5], 1
    %s884 = scalar_lea.sflag [#allocation5], 1
    %885 = vsyncpa %s884, 1

</llo_original>
